<compile_context>
chip_gen: v7x
topology: tpu7x:2x2x1
jax: 0.10.0
libtpu: 0.0.40
codegen_flags: <defaults>
</compile_context>

<pallas_src>
import functools

import jax
import jax.numpy as jnp
from jax import lax
from jax.experimental import pallas as pl
from jax.experimental.pallas import tpu as pltpu

LANE = 128        # vreg lane width
SUB = 8           # vreg sublane count (f32)
NCORES = 2        # leading "parallel" grid axis (2 TCs on v7x; harmless elsewhere)
TM_MAX = 4096     # rows per block -> (4096,128) f32 = 2 MiB per input block
                  # (on v7x, tm_max=8192 amortizes per-step overhead further)
SUB_ROWS_MAX = 512  # rows per inner fori_loop chunk (bounds temp live ranges)


def _loss_kernel(eps_ref, o_ref, y_ref, sq_out, ad_out, mp_out,
                 *, rows, tm, nb, half, ncores, sub_rows):
    """Accumulate per-core (8,128) partial sums of d^2, |d|, |d|/|y+eps|."""
    c = pl.program_id(0)   # core-split axis ("parallel")
    i = pl.program_id(1)   # reduction axis ("arbitrary")

    @pl.when(i == 0)
    def _init():
        sq_out[...] = jnp.zeros_like(sq_out)
        ad_out[...] = jnp.zeros_like(ad_out)
        mp_out[...] = jnp.zeros_like(mp_out)

    blk = c * half + i
    eps = eps_ref[0]

    def step(r0, nr):
        o = o_ref[pl.ds(r0, nr), :].astype(jnp.float32)
        y = y_ref[pl.ds(r0, nr), :].astype(jnp.float32)
        d = o - y
        ad = jnp.abs(d)
        sq = d * d
        a = jnp.abs(y + eps)                 # |(o-y)/(y+eps)| == |o-y| / |y+eps|
        r = pl.reciprocal(a, approx=True)    # EUP slot (idle otherwise)
        r = r * (2.0 - a * r)                # one Newton step -> ~1e-7 rel err
        mp = ad * r

        def fold(x):  # (nr,128) -> (8,128): elementwise VPU adds only
            return jnp.sum(x.reshape(nr // SUB, SUB, LANE), axis=0)

        sq_out[...] += fold(sq)
        ad_out[...] += fold(ad)
        mp_out[...] += fold(mp)

    def accum(nrows):
        # nrows is a static Python int, multiple of SUB, <= tm.
        n_full = nrows // sub_rows
        rem = nrows - n_full * sub_rows
        if n_full > 0:
            def body(j, carry):
                step(pl.multiple_of(j * sub_rows, sub_rows), sub_rows)
                return carry
            lax.fori_loop(0, n_full, body, 0)
        if rem > 0:
            step(n_full * sub_rows, rem)

    valid_last = rows - (nb - 1) * tm        # static, multiple of SUB
    ragged = valid_last != tm                # static
    has_dup = ncores * half != nb            # static

    if not ragged and not has_dup:
        # Fast path for the common case: no scalar tests at all.
        accum(tm)
    elif not ragged:
        @pl.when(blk < nb)                   # skip the clamped duplicate block
        def _():
            accum(tm)
    else:
        @pl.when(blk < nb - 1)               # full interior blocks
        def _():
            accum(tm)

        @pl.when(blk == nb - 1)              # statically-shorter last block
        def _():
            accum(valid_last)


def my_custom_loss(output, Y, eps, *, tm_max=TM_MAX):
    """Pallas equivalent of MyCustomLoss.forward(output, Y).

    Returns (rmse, mae, mape) as float32 scalars. eps may be a Python float or
    scalar array (runtime input; changing it does not recompile).
    """
    o = jnp.ravel(jnp.asarray(output))   # keep native dtype
    y = jnp.ravel(jnp.asarray(Y))
    n = int(o.shape[0])
    eps_f = jnp.asarray(eps, jnp.float32)

    # Row alignment: 8 rows for 4B dtypes, 16 for 2B, 32 for 1B (packing rule).
    itemsize = min(jnp.dtype(o.dtype).itemsize, jnp.dtype(y.dtype).itemsize)
    row_align = max(SUB, 32 // max(int(itemsize), 1))
    chunk = row_align * LANE

    n_main = (n // chunk) * chunk            # aligned prefix handled by kernel
    sq_sum = jnp.float32(0.0)
    ad_sum = jnp.float32(0.0)
    mp_sum = jnp.float32(0.0)

    if n_main > 0:
        rows = n_main // LANE                # multiple of row_align (>= 8)
        o2 = o[:n_main].reshape(rows, LANE)  # zero-copy prefix, no jnp.pad
        y2 = y[:n_main].reshape(rows, LANE)

        tm_cap = max(row_align, (int(tm_max) // row_align) * row_align)
        tm = min(tm_cap, rows)               # multiple of row_align
        nb = -(-rows // tm)                  # number of row blocks
        ncores = min(NCORES, nb)             # no wasted split for tiny inputs
        half = -(-nb // ncores)              # blocks per core
        grid = (ncores, half)

        sub_rows = SUB_ROWS_MAX              # largest power-of-2-ish divisor of tm
        while tm % sub_rows != 0:
            sub_rows //= 2

        if ncores * half != nb:
            # Clamp so the (at most one) duplicate block's DMA stays in bounds;
            # its compute is skipped inside the kernel.
            def data_map(c, i, eps_ref):
                return (jnp.minimum(c * half + i, nb - 1), 0)
        else:
            def data_map(c, i, eps_ref):
                return (c * half + i, 0)

        kernel = functools.partial(
            _loss_kernel, rows=rows, tm=tm, nb=nb, half=half,
            ncores=ncores, sub_rows=sub_rows)

        part_shape = jax.ShapeDtypeStruct((ncores, SUB, LANE), jnp.float32)
        part_spec = pl.BlockSpec((None, SUB, LANE), lambda c, i, eps_ref: (c, 0, 0))

        sq_p, ad_p, mp_p = pl.pallas_call(
            kernel,
            out_shape=(part_shape, part_shape, part_shape),
            grid_spec=pltpu.PrefetchScalarGridSpec(
                num_scalar_prefetch=1,       # eps -> SMEM scalar
                grid=grid,
                in_specs=[
                    pl.BlockSpec((tm, LANE), data_map),
                    pl.BlockSpec((tm, LANE), data_map),
                ],
                out_specs=(part_spec, part_spec, part_spec),
            ),
            compiler_params=pltpu.CompilerParams(
                dimension_semantics=("parallel", "arbitrary"),
                vmem_limit_bytes=32 * 1024 * 1024,
            ),
        )(eps_f.reshape((1,)), o2, y2)

        sq_sum = jnp.sum(sq_p)
        ad_sum = jnp.sum(ad_p)
        mp_sum = jnp.sum(mp_p)

    n_tail = n - n_main
    if n_tail > 0:
        # <= chunk-1 elements: tiny plain-JAX epilogue instead of padding HBM.
        ot = o[n_main:].astype(jnp.float32)
        yt = y[n_main:].astype(jnp.float32)
        dt = ot - yt
        sq_sum = sq_sum + jnp.sum(dt * dt)
        ad_sum = ad_sum + jnp.sum(jnp.abs(dt))
        mp_sum = mp_sum + jnp.sum(jnp.abs(dt / (yt + eps_f)))

    inv_n = 1.0 / float(n)
    rmse = jnp.sqrt(sq_sum * inv_n)
    mae = ad_sum * inv_n
    mape = mp_sum * inv_n
    return rmse, mae, mape


def _check(output, Y, eps, **kw):
    rmse, mae, mape = my_custom_loss(output, Y, eps, **kw)
    jax.block_until_ready((rmse, mae, mape))
    d = output.astype(jnp.float32) - Y.astype(jnp.float32)
    ref_rmse = jnp.sqrt(jnp.mean(d * d))
    ref_mae = jnp.mean(jnp.abs(d))
    ref_mape = jnp.mean(jnp.abs(d / (Y.astype(jnp.float32) + eps)))
    for got, ref, name in ((rmse, ref_rmse, "rmse"),
                           (mae, ref_mae, "mae"),
                           (mape, ref_mape, "mape")):
        g, r = float(got), float(ref)
        assert abs(g - r) <= 1e-5 + 1e-5 * abs(r), (name, g, r)


if __name__ == "__main__":
    key = jax.random.PRNGKey(0)

    # 1) Primary NCHW-like case (single block, single core).
    k1, k2, key = jax.random.split(key, 3)
    shape = (2, 4, 16, 16)
    Y = jax.random.uniform(k1, shape, jnp.float32, minval=1.0, maxval=5.0)
    out = Y + 0.1 * jax.random.normal(k2, shape, dtype=jnp.float32)
    eps = float(Y.min()) / (float(Y.max()) - float(Y.min()))   # as in __init__
    _check(out, Y, eps)

    # 2) Ragged element count (exercises the plain-JAX tail epilogue).
    k1, k2, key = jax.random.split(key, 3)
    shape = (3, 5, 17, 13)
    Y = jax.random.uniform(k1, shape, jnp.float32, minval=2.0, maxval=6.0)
    out = Y + 0.05 * jax.random.normal(k2, shape, dtype=jnp.float32)
    eps = float(Y.min()) / (float(Y.max()) - float(Y.min()))
    _check(out, Y, eps)

    # 3) Odd block count: 2-core split with one clamped duplicate block
    #    (compute-skip path) and cross-step accumulation.
    k1, k2, key = jax.random.split(key, 3)
    shape = (6, 4, 32, 32)   # 24576 elems -> 192 rows -> 3 blocks of 64 rows
    Y = jax.random.uniform(k1, shape, jnp.float32, minval=1.0, maxval=3.0)
    out = Y + 0.2 * jax.random.normal(k2, shape, dtype=jnp.float32)
    eps = float(Y.min()) / (float(Y.max()) - float(Y.min()))
    _check(out, Y, eps, tm_max=64)

    # 4) Ragged LAST BLOCK (rows % tm != 0) plus a duplicate block.
    _check(out, Y, eps, tm_max=80)   # 192 rows -> blocks of 80,80,32

    # 5) Negative targets: checks the |y+eps| denominator (MAPE sign fix).
    k1, k2, key = jax.random.split(key, 3)
    shape = (2, 4, 16, 16)
    Y = jax.random.uniform(k1, shape, jnp.float32, minval=-5.0, maxval=-1.0)
    out = Y + 0.1 * jax.random.normal(k2, shape, dtype=jnp.float32)
    _check(out, Y, 0.1)

    print("KERNEL_OK")
</pallas_src>

<mosaic_0001>
module attributes {stable_mosaic.version = 11 : i64} {
  func.func @_loss_kernel(%arg0: i32, %arg1: i32, %arg2: memref<1xf32, #tpu.memory_space<smem>>, %arg3: memref<16x128xf32, #tpu.memory_space<vmem>>, %arg4: memref<16x128xf32, #tpu.memory_space<vmem>>, %arg5: memref<1x8x128xf32, #tpu.memory_space<vmem>>, %arg6: memref<1x8x128xf32, #tpu.memory_space<vmem>>, %arg7: memref<1x8x128xf32, #tpu.memory_space<vmem>>) attributes {dimension_semantics = [#tpu.dimension_semantics<parallel>, #tpu.dimension_semantics<arbitrary>], iteration_bounds = array<i64: 1, 1>, scalar_prefetch = 1 : i64, scratch_operands = 0 : i64, tpu.core_type = #tpu.core_type<tc>, window_params = [{transform_indices = @transform_0, window_bounds = array<i64: 16, 128>}, {transform_indices = @transform_1, window_bounds = array<i64: 16, 128>}, {transform_indices = @transform_2, window_bounds = array<i64: 1, 8, 128>}, {transform_indices = @transform_3, window_bounds = array<i64: 1, 8, 128>}, {transform_indices = @transform_4, window_bounds = array<i64: 1, 8, 128>}]} {
    %c0_i32 = arith.constant 0 : i32
    %0 = arith.cmpi eq, %arg1, %c0_i32 : i32
    %1 = arith.extui %0 : i1 to i32
    %c0_i32_0 = arith.constant 0 : i32
    %2 = arith.cmpi ne, %1, %c0_i32_0 : i32
    scf.if %2 {
      %cst_25 = arith.constant 0.000000e+00 : f32
      %46 = vector.broadcast %cst_25 : f32 to vector<8x128xf32>
      %c0_26 = arith.constant 0 : index
      %c0_27 = arith.constant 0 : index
      %c0_28 = arith.constant 0 : index
      %47 = vector.load %arg5[%c0_26, %c0_27, %c0_28] : memref<1x8x128xf32, #tpu.memory_space<vmem>>, vector<1x8x128xf32>
      %48 = vector.shape_cast %47 : vector<1x8x128xf32> to vector<8x128xf32>
      %49 = vector.shape_cast %46 : vector<8x128xf32> to vector<1x8x128xf32>
      tpu.vector_store %arg5[%c0_26, %c0_27, %c0_28], %49 {strides = array<i32>} : memref<1x8x128xf32, #tpu.memory_space<vmem>>, vector<1x8x128xf32>,
      %cst_29 = arith.constant 0.000000e+00 : f32
      %50 = vector.broadcast %cst_29 : f32 to vector<8x128xf32>
      %c0_30 = arith.constant 0 : index
      %c0_31 = arith.constant 0 : index
      %c0_32 = arith.constant 0 : index
      %51 = vector.load %arg6[%c0_30, %c0_31, %c0_32] : memref<1x8x128xf32, #tpu.memory_space<vmem>>, vector<1x8x128xf32>
      %52 = vector.shape_cast %51 : vector<1x8x128xf32> to vector<8x128xf32>
      %53 = vector.shape_cast %50 : vector<8x128xf32> to vector<1x8x128xf32>
      tpu.vector_store %arg6[%c0_30, %c0_31, %c0_32], %53 {strides = array<i32>} : memref<1x8x128xf32, #tpu.memory_space<vmem>>, vector<1x8x128xf32>,
      %cst_33 = arith.constant 0.000000e+00 : f32
      %54 = vector.broadcast %cst_33 : f32 to vector<8x128xf32>
      %c0_34 = arith.constant 0 : index
      %c0_35 = arith.constant 0 : index
      %c0_36 = arith.constant 0 : index
      %55 = vector.load %arg7[%c0_34, %c0_35, %c0_36] : memref<1x8x128xf32, #tpu.memory_space<vmem>>, vector<1x8x128xf32>
      %56 = vector.shape_cast %55 : vector<1x8x128xf32> to vector<8x128xf32>
      %57 = vector.shape_cast %54 : vector<8x128xf32> to vector<1x8x128xf32>
      tpu.vector_store %arg7[%c0_34, %c0_35, %c0_36], %57 {strides = array<i32>} : memref<1x8x128xf32, #tpu.memory_space<vmem>>, vector<1x8x128xf32>,
    } else {
    }
    %c0 = arith.constant 0 : index
    %3 = memref.load %arg2[%c0] : memref<1xf32, #tpu.memory_space<smem>>
    %c0_i32_1 = arith.constant 0 : i32
    %c16_i32 = arith.constant 16 : i32
    %4 = arith.muli %c0_i32_1, %c16_i32 : i32
    %5 = tpu.assume_multiple %4, 16 : i32
    %6 = arith.index_cast %5 : i32 to index
    %c0_2 = arith.constant 0 : index
    %7 = vector.load %arg3[%6, %c0_2] : memref<16x128xf32, #tpu.memory_space<vmem>>, vector<16x128xf32>
    %8 = arith.index_cast %5 : i32 to index
    %c0_3 = arith.constant 0 : index
    %9 = vector.load %arg4[%8, %c0_3] : memref<16x128xf32, #tpu.memory_space<vmem>>, vector<16x128xf32>
    %10 = arith.subf %7, %9 : vector<16x128xf32>
    %11 = math.absf %10 : vector<16x128xf32>
    %12 = arith.mulf %10, %10 : vector<16x128xf32>
    %13 = vector.broadcast %3 : f32 to vector<16x128xf32>
    %14 = arith.addf %9, %13 : vector<16x128xf32>
    %15 = math.absf %14 : vector<16x128xf32>
    %16 = tpu.reciprocal %15 {approx = true} : vector<16x128xf32> -> vector<16x128xf32>
    %17 = arith.mulf %15, %16 : vector<16x128xf32>
    %cst = arith.constant 2.000000e+00 : f32
    %18 = vector.broadcast %cst : f32 to vector<16x128xf32>
    %19 = arith.subf %18, %17 : vector<16x128xf32>
    %20 = arith.mulf %16, %19 : vector<16x128xf32>
    %21 = arith.mulf %11, %20 : vector<16x128xf32>
    %c0_4 = arith.constant 0 : index
    %c0_5 = arith.constant 0 : index
    %c0_6 = arith.constant 0 : index
    %22 = vector.load %arg5[%c0_4, %c0_5, %c0_6] : memref<1x8x128xf32, #tpu.memory_space<vmem>>, vector<1x8x128xf32>
    %23 = vector.shape_cast %22 : vector<1x8x128xf32> to vector<8x128xf32>
    %24 = vector.shape_cast %12 : vector<16x128xf32> to vector<2x8x128xf32>
    %cst_7 = arith.constant dense<0.000000e+00> : vector<8x128xf32>
    %25 = vector.multi_reduction <add>, %24, %cst_7 [0] : vector<2x8x128xf32> to vector<8x128xf32>
    %26 = arith.addf %23, %25 : vector<8x128xf32>
    %c0_8 = arith.constant 0 : index
    %c0_9 = arith.constant 0 : index
    %c0_10 = arith.constant 0 : index
    %27 = vector.load %arg5[%c0_8, %c0_9, %c0_10] : memref<1x8x128xf32, #tpu.memory_space<vmem>>, vector<1x8x128xf32>
    %28 = vector.shape_cast %27 : vector<1x8x128xf32> to vector<8x128xf32>
    %29 = vector.shape_cast %26 : vector<8x128xf32> to vector<1x8x128xf32>
    tpu.vector_store %arg5[%c0_8, %c0_9, %c0_10], %29 {strides = array<i32>} : memref<1x8x128xf32, #tpu.memory_space<vmem>>, vector<1x8x128xf32>,
    %c0_11 = arith.constant 0 : index
    %c0_12 = arith.constant 0 : index
    %c0_13 = arith.constant 0 : index
    %30 = vector.load %arg6[%c0_11, %c0_12, %c0_13] : memref<1x8x128xf32, #tpu.memory_space<vmem>>, vector<1x8x128xf32>
    %31 = vector.shape_cast %30 : vector<1x8x128xf32> to vector<8x128xf32>
    %32 = vector.shape_cast %11 : vector<16x128xf32> to vector<2x8x128xf32>
    %cst_14 = arith.constant dense<0.000000e+00> : vector<8x128xf32>
    %33 = vector.multi_reduction <add>, %32, %cst_14 [0] : vector<2x8x128xf32> to vector<8x128xf32>
    %34 = arith.addf %31, %33 : vector<8x128xf32>
    %c0_15 = arith.constant 0 : index
    %c0_16 = arith.constant 0 : index
    %c0_17 = arith.constant 0 : index
    %35 = vector.load %arg6[%c0_15, %c0_16, %c0_17] : memref<1x8x128xf32, #tpu.memory_space<vmem>>, vector<1x8x128xf32>
    %36 = vector.shape_cast %35 : vector<1x8x128xf32> to vector<8x128xf32>
    %37 = vector.shape_cast %34 : vector<8x128xf32> to vector<1x8x128xf32>
    tpu.vector_store %arg6[%c0_15, %c0_16, %c0_17], %37 {strides = array<i32>} : memref<1x8x128xf32, #tpu.memory_space<vmem>>, vector<1x8x128xf32>,
    %c0_18 = arith.constant 0 : index
    %c0_19 = arith.constant 0 : index
    %c0_20 = arith.constant 0 : index
    %38 = vector.load %arg7[%c0_18, %c0_19, %c0_20] : memref<1x8x128xf32, #tpu.memory_space<vmem>>, vector<1x8x128xf32>
    %39 = vector.shape_cast %38 : vector<1x8x128xf32> to vector<8x128xf32>
    %40 = vector.shape_cast %21 : vector<16x128xf32> to vector<2x8x128xf32>
    %cst_21 = arith.constant dense<0.000000e+00> : vector<8x128xf32>
    %41 = vector.multi_reduction <add>, %40, %cst_21 [0] : vector<2x8x128xf32> to vector<8x128xf32>
    %42 = arith.addf %39, %41 : vector<8x128xf32>
    %c0_22 = arith.constant 0 : index
    %c0_23 = arith.constant 0 : index
    %c0_24 = arith.constant 0 : index
    %43 = vector.load %arg7[%c0_22, %c0_23, %c0_24] : memref<1x8x128xf32, #tpu.memory_space<vmem>>, vector<1x8x128xf32>
    %44 = vector.shape_cast %43 : vector<1x8x128xf32> to vector<8x128xf32>
    %45 = vector.shape_cast %42 : vector<8x128xf32> to vector<1x8x128xf32>
    tpu.vector_store %arg7[%c0_22, %c0_23, %c0_24], %45 {strides = array<i32>} : memref<1x8x128xf32, #tpu.memory_space<vmem>>, vector<1x8x128xf32>,
    %c1_i32 = arith.constant 1 : i32
    return
  }
  func.func @transform_0(%arg0: i32, %arg1: i32, %arg2: memref<1xf32, #tpu.memory_space<smem>>) -> (i32, i32) {
    %c1_i32 = arith.constant 1 : i32
    %0 = arith.muli %arg0, %c1_i32 : i32
    %1 = arith.addi %0, %arg1 : i32
    %c0_i32 = arith.constant 0 : i32
    %c0_i32_0 = arith.constant 0 : i32
    return %1, %c0_i32 : i32, i32
  }
  func.func @transform_1(%arg0: i32, %arg1: i32, %arg2: memref<1xf32, #tpu.memory_space<smem>>) -> (i32, i32) {
    %c1_i32 = arith.constant 1 : i32
    %0 = arith.muli %arg0, %c1_i32 : i32
    %1 = arith.addi %0, %arg1 : i32
    %c0_i32 = arith.constant 0 : i32
    %c0_i32_0 = arith.constant 0 : i32
    return %1, %c0_i32 : i32, i32
  }
  func.func @transform_2(%arg0: i32, %arg1: i32, %arg2: memref<1xf32, #tpu.memory_space<smem>>) -> (i32, i32, i32) {
    %c0_i32 = arith.constant 0 : i32
    %c0_i32_0 = arith.constant 0 : i32
    %c0_i32_1 = arith.constant 0 : i32
    return %arg0, %c0_i32, %c0_i32_0 : i32, i32, i32
  }
  func.func @transform_3(%arg0: i32, %arg1: i32, %arg2: memref<1xf32, #tpu.memory_space<smem>>) -> (i32, i32, i32) {
    %c0_i32 = arith.constant 0 : i32
    %c0_i32_0 = arith.constant 0 : i32
    %c0_i32_1 = arith.constant 0 : i32
    return %arg0, %c0_i32, %c0_i32_0 : i32, i32, i32
  }
  func.func @transform_4(%arg0: i32, %arg1: i32, %arg2: memref<1xf32, #tpu.memory_space<smem>>) -> (i32, i32, i32) {
    %c0_i32 = arith.constant 0 : i32
    %c0_i32_0 = arith.constant 0 : i32
    %c0_i32_1 = arith.constant 0 : i32
    return %arg0, %c0_i32, %c0_i32_0 : i32, i32, i32
  }
}

</mosaic_0001>

<llo_original>
// kernel: tpu_custom_call.1
$region0: #{tpu_custom_call.1}
  #allocation0 [shape = 'u32[]', space=smem, size = 0x4, offset = 0x4, fixed_abs, tag = 'smem constant byte address 0x4 - core index']
  #allocation1 [shape = 'u32[144,128]{1,0:T(1,128)}', space=vmem, size = 0x12000, scoped, tag = 'internal scratch']
  #allocation2 [shape = 's32[1]{0}', space=sflag, size = 0x4, scoped, tag = 'scoped memory for tpu_custom_call.1']
  #allocation3 [shape = 'f32[1]{0:T(128)S(6)}', space=smem, size = 0x200, scoped, tag = 'prefetched SMEM operand 0']
  %s0 = inlined_call_operand.<no memory space> [shape: f32[1], index: 0, kind: input, shape index: {}]
  %s1 = inlined_call_operand.hbm [shape: f32[16,128], index: 1, kind: input, shape index: {}]
  %s2 = inlined_call_operand.hbm [shape: f32[16,128], index: 2, kind: input, shape index: {}]
  %s3 = inlined_call_operand.hbm [shape: f32[1,8,128], index: 3, kind: output, shape index: {0}]
  %s4 = inlined_call_operand.hbm [shape: f32[1,8,128], index: 4, kind: output, shape index: {1}]
  %s5 = inlined_call_operand.hbm [shape: f32[1,8,128], index: 5, kind: output, shape index: {2}]
  %6 = xla_tuple %s3, %s4, %s5
  %s7 = sld [smem:[#allocation0]]
  $region46: #{tpu_custom_call.1} parent=0
    _
  %s9 = ssub.s32 1, %s7
  %s10 = scalar_select 0, %s9, %s7
  %11 = sst [smem:[#allocation3]] %s0
  $region1: #{tpu_custom_call.1} parent=0
    #allocation4 [shape = 'u8[8192]{0}', space=vmem, size = 0x2000, scoped, tag = 'input window, operand 1, single buffered']
    #allocation5 [shape = 's32[1]{0}', space=sflag, size = 0x4, scoped, tag = 'scoped memory for tpu_custom_call.1']
    #allocation6 [shape = 's32[1]{0}', space=sflag, size = 0x4, scoped, tag = 'scoped memory for tpu_custom_call.1']
    #allocation7 [shape = 'u8[8192]{0}', space=vmem, size = 0x2000, scoped, tag = 'input window, operand 2, single buffered']
    #allocation8 [shape = 's32[1]{0}', space=sflag, size = 0x4, scoped, tag = 'scoped memory for tpu_custom_call.1']
    #allocation9 [shape = 'u8[4096]{0}', space=vmem, size = 0x1000, scoped, tag = 'output window, operand 0, single buffered']
    #allocation10 [shape = 'u8[4096]{0}', space=vmem, size = 0x1000, scoped, tag = 'output window, operand 1, single buffered']
    #allocation11 [shape = 's32[1]{0}', space=sflag, size = 0x4, scoped, tag = 'scoped memory for tpu_custom_call.1']
    #allocation12 [shape = 'u8[4096]{0}', space=vmem, size = 0x1000, scoped, tag = 'output window, operand 2, single buffered']
    %12 = vsyncpa [#allocation5], 0
    %13 = vsyncpa [#allocation8], 0
    %14 = vsyncpa [#allocation6], 0
    %15 = vsyncpa [#allocation11], 0
    // Predicated region
    $region2: #{tpu_custom_call.1} parent=1 // pred_check
      _
    $region3: #{tpu_custom_call.1} parent=1 // pred_check_branch
      %17 = sbr.rel (0) target = $region5
    $region4: #{tpu_custom_call.1} parent=1 // pred_region
      %s18 = sadd.s32 0, 0
      %s19 = smul.u32 2, %s18
      %s21 = ssub.s32 256, 256
      %22 = vsyncadd [#allocation5], %s21
      %s23 = smul.addr %s19, 128
      %s24 = scalar_lea.hbm %s1, %s23
      %s25 = sshll.u32 [#allocation4], 4
      %s26 = int_to_ptr.vmem [resolvable:$true] %s25
      %31 = dma.hbm_to_vmem [thread:$0]  %s24, 256, %s26, [#allocation5], 128, 128, 8
    $region5: #{tpu_custom_call.1} parent=1 // pred_fallthru
      _
    // Predicated region
    $region6: #{tpu_custom_call.1} parent=1 // pred_check
      _
    $region7: #{tpu_custom_call.1} parent=1 // pred_check_branch
      %33 = sbr.rel (0) target = $region9
    $region8: #{tpu_custom_call.1} parent=1 // pred_region
      %s34 = sadd.s32 0, 0
      %s35 = smul.u32 2, %s34
      %s37 = ssub.s32 256, 256
      %38 = vsyncadd [#allocation8], %s37
      %s39 = smul.addr %s35, 128
      %s40 = scalar_lea.hbm %s2, %s39
      %s41 = sshll.u32 [#allocation7], 4
      %s42 = int_to_ptr.vmem [resolvable:$true] %s41
      %47 = dma.hbm_to_vmem [thread:$0]  %s40, 256, %s42, [#allocation8], 128, 128, 8
    $region9: #{tpu_custom_call.1} parent=1 // pred_fallthru
      _
    // Predicated region
    $region10: #{tpu_custom_call.1} parent=1 // pred_check
      _
    $region11: #{tpu_custom_call.1} parent=1 // pred_check_branch
      %49 = sbr.rel (0) target = $region13
    $region12: #{tpu_custom_call.1} parent=1 // pred_region
      %50 = dma.done [#allocation5], 256
    $region13: #{tpu_custom_call.1} parent=1 // pred_fallthru
      _
    // Predicated region
    $region14: #{tpu_custom_call.1} parent=1 // pred_check
      _
    $region15: #{tpu_custom_call.1} parent=1 // pred_check_branch
      %52 = sbr.rel (0) target = $region17
    $region16: #{tpu_custom_call.1} parent=1 // pred_region
      %53 = dma.done [#allocation8], 256
    $region17: #{tpu_custom_call.1} parent=1 // pred_fallthru
      _
    %s54 = sadd.s32 0, 0
    %s55 = smul.u32 2, %s54
    %s56 = sadd.s32 0, 0
    %s57 = smul.u32 2, %s56
    %p58 = scmp.eq.s32.totalorder 0, 0
    // Predicated region
    $region18: #{tpu_custom_call.1} parent=1 // pred_check
      %p59 = pneg %p58
    $region19: #{tpu_custom_call.1} parent=1 // pred_check_branch
      %61 = sbr.rel (%p59) target = $region21
    $region20: #{tpu_custom_call.1} parent=1 // pred_region
      %62 = vst [vmem:[#allocation9] sm:$0xff] 0.0
      %63 = vst [vmem:[#allocation10] sm:$0xff] 0.0
      %64 = vst [vmem:[#allocation12] sm:$0xff] 0.0
    $region21: #{tpu_custom_call.1} parent=1 // pred_fallthru
      _
    %s65 = sld [smem:[#allocation3]]
    %v66 = vld [vmem:[#allocation4] sm:$0xff]
    %v67 = vld [vmem:[#allocation4 + $0x8] sm:$0xff]
    %v68 = vld [vmem:[#allocation7] sm:$0xff]
    %v69 = vld [vmem:[#allocation7 + $0x8] sm:$0xff]
    %v70 = vsub.f32 %v66, %v68
    %v71 = vsub.f32 %v67, %v69
    %v72 = vand.u32 2147483647, %v70
    %v73 = vand.u32 2147483647, %v71
    %v74 = vmul.f32 %v70, %v70
    %v75 = vmul.f32 %v71, %v71
    %v76 = vstv %s65
    %v77 = vadd.f32 %v68, %v76
    %v78 = vadd.f32 %v69, %v76
    %v79 = vand.u32 2147483647, %v77
    %v80 = vand.u32 2147483647, %v78
    %v81 = vrcp.pop %v79
    %v82 = vrcp.pop %v80
    %v83 = vmul.f32 %v79, %v81
    %v84 = vmul.f32 %v80, %v82
    %v85 = vsub.f32 2.0, %v83
    %v86 = vsub.f32 2.0, %v84
    %v87 = vmul.f32 %v81, %v85
    %v88 = vmul.f32 %v82, %v86
    %v89 = vmul.f32 %v72, %v87
    %v90 = vmul.f32 %v73, %v88
    %v91 = vld [vmem:[#allocation9] sm:$0xff]
    %v92 = vadd.f32 %v74, %v75
    %v93 = vadd.f32 %v91, %v92
    %94 = vst [vmem:[#allocation9] sm:$0xff] %v93
    %v95 = vld [vmem:[#allocation10] sm:$0xff]
    %v96 = vadd.f32 %v72, %v73
    %v97 = vadd.f32 %v95, %v96
    %98 = vst [vmem:[#allocation10] sm:$0xff] %v97
    %v99 = vld [vmem:[#allocation12] sm:$0xff]
    %v100 = vadd.f32 %v89, %v90
    %v101 = vadd.f32 %v99, %v100
    %102 = vst [vmem:[#allocation12] sm:$0xff] %v101
    // Predicated region
    $region22: #{tpu_custom_call.1} parent=1 // pred_check
      _
    $region23: #{tpu_custom_call.1} parent=1 // pred_check_branch
      %104 = sbr.rel (0) target = $region25
    $region24: #{tpu_custom_call.1} parent=1 // pred_region
      %s106 = ssub.s32 128, 128
      %107 = vsyncadd [#allocation6], %s106
      %s109 = sshll.u32 [#allocation9], 4
      %s110 = int_to_ptr.vmem [resolvable:$true] %s109
      %112 = dma.vmem_to_hbm [thread:$0]  %s110, 128, %s3, [#allocation6]
    $region25: #{tpu_custom_call.1} parent=1 // pred_fallthru
      _
    // Predicated region
    $region26: #{tpu_custom_call.1} parent=1 // pred_check
      _
    $region27: #{tpu_custom_call.1} parent=1 // pred_check_branch
      %114 = sbr.rel (0) target = $region29
    $region28: #{tpu_custom_call.1} parent=1 // pred_region
      %s116 = ssub.s32 128, 128
      %117 = vsyncadd [#allocation11], %s116
      %s119 = sshll.u32 [#allocation10], 4
      %s120 = int_to_ptr.vmem [resolvable:$true] %s119
      %122 = dma.vmem_to_hbm [thread:$0]  %s120, 128, %s4, [#allocation11]
    $region29: #{tpu_custom_call.1} parent=1 // pred_fallthru
      _
    // Predicated region
    $region30: #{tpu_custom_call.1} parent=1 // pred_check
      _
    $region31: #{tpu_custom_call.1} parent=1 // pred_check_branch
      %124 = sbr.rel (0) target = $region33
    $region32: #{tpu_custom_call.1} parent=1 // pred_region
      %s126 = ssub.s32 128, 128
      %127 = vsyncadd [#allocation11], %s126
      %s129 = sshll.u32 [#allocation12], 4
      %s130 = int_to_ptr.vmem [resolvable:$true] %s129
      %132 = dma.vmem_to_hbm [thread:$0]  %s130, 128, %s5, [#allocation11]
    $region33: #{tpu_custom_call.1} parent=1 // pred_fallthru
      _
    // Predicated region
    $region34: #{tpu_custom_call.1} parent=1 // pred_check
      _
    $region35: #{tpu_custom_call.1} parent=1 // pred_check_branch
      %134 = sbr.rel (0) target = $region37
    $region36: #{tpu_custom_call.1} parent=1 // pred_region
      %135 = dma.done [#allocation6], 128
    $region37: #{tpu_custom_call.1} parent=1 // pred_fallthru
      _
    // Predicated region
    $region38: #{tpu_custom_call.1} parent=1 // pred_check
      _
    $region39: #{tpu_custom_call.1} parent=1 // pred_check_branch
      %137 = sbr.rel (0) target = $region41
    $region40: #{tpu_custom_call.1} parent=1 // pred_region
      %138 = dma.done [#allocation11], 128
    $region41: #{tpu_custom_call.1} parent=1 // pred_fallthru
      _
    // Predicated region
    $region42: #{tpu_custom_call.1} parent=1 // pred_check
      _
    $region43: #{tpu_custom_call.1} parent=1 // pred_check_branch
      %140 = sbr.rel (0) target = $region45
    $region44: #{tpu_custom_call.1} parent=1 // pred_region
      %141 = dma.done [#allocation11], 128
    $region45: #{tpu_custom_call.1} parent=1 // pred_fallthru
      _
    %142 = vsyncpa [#allocation5], 1
    %143 = vsyncpa [#allocation8], 1
    %144 = vsyncpa [#allocation6], 1
    %145 = vsyncpa [#allocation11], 1

</llo_original>
